<compile_context>
chip_gen: v5e
topology: v5e:2x2
jax: 0.10.0
libtpu: 0.0.40
codegen_flags: <defaults>
</compile_context>

<pallas_src>
import math
from functools import partial

import jax
import jax.numpy as jnp
from jax.experimental import pallas as pl
from jax.experimental.pallas import tpu as pltpu

BN_EPS = 1e-5
LEAKY_SLOPE = 0.01          # nn.LeakyReLU default negative_slope
LANE = 128

# Tap order k = kh*3 + kw  ->  (pre-shifted plane index, row offset dh).
# Plane order (built in the wrapper):
#   0:(even row, even col)  1:(even, odd)  2:(even, even col + 1)
#   3:(odd,  even col)      4:(odd,  odd)  5:(odd,  even col + 1)
_TAPS6 = ((0, 0), (1, 0), (2, 0),
          (3, 0), (4, 0), (5, 0),
          (0, 1), (1, 1), (2, 1))


def _conv_stats_kernel(body_ref, halo_ref, w_ref, y_ref, stats_ref, xcol_ref,
                       *, ow, ts, valid):
    # body_ref : (6, C, TS)      flattened (row*OW + col) parity-plane lanes
    # halo_ref : (6, C, HALO_L)  lanes just past the body block (dh=1, last row)
    # w_ref    : (C, 9C)         folded conv weights, K index = (kh*3+kw)*C + cin
    # y_ref    : (C, TS)         conv output tile (pre-BN), NCHW-flat lanes
    # stats_ref: (C, 2)          per-batch-element [sum, sum-of-squares]
    # xcol_ref : (9C, TS)        VMEM scratch: per-tile im2col (VMEM only)
    c = y_ref.shape[0]
    t = pl.program_id(1)

    @pl.when(t == 0)
    def _():
        stats_ref[...] = jnp.zeros_like(stats_ref)

    # Stack the 9 shifted taps into the im2col scratch.  A row shift of +1 is
    # a lane shift of +OW in the flattened layout; the last output row's
    # shifted data comes from the halo block.
    for k, (q, dh) in enumerate(_TAPS6):
        r0, r1 = k * c, (k + 1) * c
        if dh == 0:
            xcol_ref[r0:r1, :] = body_ref[q]
        else:
            xcol_ref[r0:r1, 0:ts - ow] = body_ref[q, :, ow:ts]
            xcol_ref[r0:r1, ts - ow:ts] = halo_ref[q, :, 0:ow]

    # One MXU contraction per tile: (C, 9C) x (9C, th*OW) -> (C, th*OW).
    acc = jnp.dot(w_ref[...], xcol_ref[...],
                  preferred_element_type=jnp.float32)
    y_ref[...] = acc.astype(y_ref.dtype)

    # Streaming BatchNorm2d statistics (training mode, biased variance).
    # Lanes that fall in the zero row padding of the last tile are masked out.
    lane = jax.lax.broadcasted_iota(jnp.int32, acc.shape, 1)
    am = jnp.where(lane < (valid - t * ts), acc, 0.0)
    stats_ref[:, 0:1] += jnp.sum(am, axis=1, keepdims=True)
    stats_ref[:, 1:2] += jnp.sum(am * am, axis=1, keepdims=True)


def _bn_lrelu_kernel(y_ref, scale_ref, shift_ref, o_ref):
    # y_ref/o_ref: (TR, P) lane-dense rows; scale/shift: (TR, 1) per row.
    z = y_ref[...] * scale_ref[...] + shift_ref[...]
    o_ref[...] = jnp.where(z > 0, z, LEAKY_SLOPE * z)


@jax.jit
def downsample_forward(x, w, b, gamma, beta):
    """x: (N, C, H, W) f32. w: (C, C, 3, 3). b/gamma/beta: (C,). Returns NCHW."""
    # Conv bias cancels exactly under training-mode BatchNorm (mean subtraction
    # removes it; variance is unchanged), so it is dropped from the hot path.
    del b

    N, C, H, W = x.shape
    OH = (H - 1) // 2 + 1
    OW = (W - 1) // 2 + 1
    OHW = OH * OW

    # ---- tiling: rows per tile chosen so th*OW is a multiple of 128 (unmasked
    # lane-dense blocks, clean halo indexing) and the double-buffered working
    # set stays near ~16 MiB (safe on v7x's 64 MiB VMEM; v5e/v6e have slack).
    halo_l = pl.cdiv(OW, LANE) * LANE
    rq = halo_l // math.gcd(OW, halo_l)                 # row quantum
    w2_bytes = 4 * C * 9 * C
    row_bytes = 4 * C * OW * (2 * 6 + 9 + 1 + 2)        # ins(x2)+im2col+acc+y(x2)
    budget = 16 * 1024 * 1024
    cap_rows = max(rq, ((budget - 2 * w2_bytes) // max(row_bytes, 1)) // rq * rq)
    th = min(cap_rows, pl.cdiv(OH, rq) * rq)
    T = pl.cdiv(OH, th)
    TS = th * OW                                        # lanes per tile
    P = T * TS                                          # padded per-image spatial
    L = P + halo_l

    # ---- glue: zero-pad, split into 6 pre-column-shifted parity planes, and
    # flatten rows*cols onto the lane axis.  NCHW stays NCHW (no transpose),
    # and no im2col / stripe gather ever hits HBM.
    Rr = T * th + 1
    Hp = 2 * Rr
    Wp = 2 * OW + 1
    xp = jnp.pad(x, ((0, 0), (0, 0), (1, Hp - H - 1), (1, Wp - W - 1)))
    ee = xp[:, :, 0::2, 0::2]          # (N, C, Rr, OW+1)
    eo = xp[:, :, 0::2, 1::2]          # (N, C, Rr, OW)
    oe = xp[:, :, 1::2, 0::2]
    oo = xp[:, :, 1::2, 1::2]
    planes = jnp.stack(
        [ee[..., 0:OW], eo[..., 0:OW], ee[..., 1:OW + 1],
         oe[..., 0:OW], oo[..., 0:OW], oe[..., 1:OW + 1]],
        axis=1)                         # (N, 6, C, Rr, OW)
    flat = planes.reshape(N, 6, C, Rr * OW)
    flat = jnp.pad(flat, ((0, 0), (0, 0), (0, 0), (0, L - Rr * OW)))

    # Folded conv weights: (C_out, 9*C_in), K index = (kh*3+kw)*C_in + c_in.
    w2 = jnp.transpose(w, (0, 2, 3, 1)).reshape(C, 9 * C).astype(jnp.float32)

    hs = TS // halo_l
    kernel = partial(_conv_stats_kernel, ow=OW, ts=TS, valid=OHW)

    # ---- pass 1: conv (single K=9C matmul per tile) + streaming BN stats ----
    y, stats = pl.pallas_call(
        kernel,
        out_shape=(jax.ShapeDtypeStruct((N, C, P), jnp.float32),
                   jax.ShapeDtypeStruct((N, C, 2), jnp.float32)),
        grid=(N, T),
        in_specs=[
            pl.BlockSpec((None, 6, C, TS), lambda n, t: (n, 0, 0, t)),
            pl.BlockSpec((None, 6, C, halo_l),
                         lambda n, t: (n, 0, 0, (t + 1) * hs)),
            pl.BlockSpec((C, 9 * C), lambda n, t: (0, 0)),
        ],
        out_specs=(
            pl.BlockSpec((None, C, TS), lambda n, t: (n, 0, t)),
            pl.BlockSpec((None, C, 2), lambda n, t: (n, 0, 0)),
        ),
        scratch_shapes=[pltpu.VMEM((9 * C, TS), jnp.float32)],
        compiler_params=pltpu.CompilerParams(
            dimension_semantics=("parallel", "arbitrary"),
            vmem_limit_bytes=48 * 1024 * 1024),
    )(flat, flat, w2)

    # ---- fold BN into one per-channel scale/shift (O(C) work, done in XLA) ----
    m = float(N * OHW)
    mean = jnp.sum(stats[:, :, 0], axis=0) / m
    var = jnp.maximum(jnp.sum(stats[:, :, 1], axis=0) / m - mean * mean, 0.0)
    scale = gamma.astype(jnp.float32) * jax.lax.rsqrt(var + BN_EPS)
    shift = beta.astype(jnp.float32) - mean * scale
    # TODO(synk): nn.BatchNorm2d running_mean/running_var buffer updates are
    # stateful training bookkeeping and do not affect this forward output.

    # ---- pass 2: fused scale/shift + LeakyReLU on the NCHW-flat view ----
    NC = N * C
    y2 = y.reshape(NC, P)                                  # free (already flat)
    scale_r = jnp.tile(scale, N).reshape(NC, 1)
    shift_r = jnp.tile(shift, N).reshape(NC, 1)

    row_cap = max(8, ((budget // 2) // max(4 * P, 1)) // 8 * 8)
    TR = NC if NC <= row_cap else row_cap
    out = pl.pallas_call(
        _bn_lrelu_kernel,
        out_shape=jax.ShapeDtypeStruct((NC, P), jnp.float32),
        grid=(pl.cdiv(NC, TR),),
        in_specs=[pl.BlockSpec((TR, P), lambda i: (i, 0)),
                  pl.BlockSpec((TR, 1), lambda i: (i, 0)),
                  pl.BlockSpec((TR, 1), lambda i: (i, 0))],
        out_specs=pl.BlockSpec((TR, P), lambda i: (i, 0)),
        input_output_aliases={0: 0},
        compiler_params=pltpu.CompilerParams(
            dimension_semantics=("parallel",),
            vmem_limit_bytes=48 * 1024 * 1024),
    )(y2, scale_r, shift_r)

    # Drop the (zero-derived) row padding and restore the 4-D NCHW shape.
    # When the tiling is exact (P == OH*OW) the slice is a no-op.
    return out.reshape(N, C, P)[:, :, :OHW].reshape(N, C, OH, OW)


if __name__ == "__main__":
    key = jax.random.PRNGKey(0)
    kx, kw_, kb = jax.random.split(key, 3)

    N, C, H, W = 2, 4, 16, 16
    x = jax.random.normal(kx, (N, C, H, W), dtype=jnp.float32)

    # Parameter init with shapes matching nn.Conv2d(C, C, 3) + nn.BatchNorm2d(C).
    fan_in = C * 3 * 3
    bound = 1.0 / (fan_in ** 0.5)
    w = jax.random.uniform(kw_, (C, C, 3, 3), jnp.float32, -bound, bound)
    b = jax.random.uniform(kb, (C,), jnp.float32, -bound, bound)
    gamma = jnp.ones((C,), jnp.float32)   # BatchNorm2d default weight
    beta = jnp.zeros((C,), jnp.float32)   # BatchNorm2d default bias

    out = downsample_forward(x, w, b, gamma, beta)
    jax.block_until_ready(out)
    assert out.shape == (N, C, H // 2, W // 2), out.shape
    assert bool(jnp.all(jnp.isfinite(out)))

    # Pure-JAX reference of the PyTorch module (training-mode BN, with bias).
    conv = jax.lax.conv_general_dilated(
        x, w, window_strides=(2, 2), padding=((1, 1), (1, 1)),
        dimension_numbers=("NCHW", "OIHW", "NCHW")) + b[None, :, None, None]
    mu = conv.mean(axis=(0, 2, 3), keepdims=True)
    var = conv.var(axis=(0, 2, 3), keepdims=True)
    ref = (conv - mu) * jax.lax.rsqrt(var + BN_EPS)
    ref = ref * gamma[None, :, None, None] + beta[None, :, None, None]
    ref = jnp.where(ref > 0, ref, LEAKY_SLOPE * ref)
    err = float(jnp.max(jnp.abs(out - ref)))
    assert err < 2e-3, f"max abs err vs reference: {err}"

    print("KERNEL_OK")
</pallas_src>

<mosaic_0001>
module attributes {stable_mosaic.version = 11 : i64} {
  func.func @_conv_stats_kernel(%arg0: i32, %arg1: i32, %arg2: memref<1x6x4x128xf32, #tpu.memory_space<vmem>>, %arg3: memref<1x6x4x128xf32, #tpu.memory_space<vmem>>, %arg4: memref<4x36xf32, #tpu.memory_space<vmem>>, %arg5: memref<1x4x128xf32, #tpu.memory_space<vmem>>, %arg6: memref<1x4x2xf32, #tpu.memory_space<vmem>>, %arg7: memref<36x128xf32, #tpu.memory_space<vmem>>) attributes {dimension_semantics = [#tpu.dimension_semantics<parallel>, #tpu.dimension_semantics<arbitrary>], iteration_bounds = array<i64: 2, 1>, scalar_prefetch = 0 : i64, scratch_operands = 1 : i64, tpu.core_type = #tpu.core_type<tc>, window_params = [{transform_indices = @transform_0, window_bounds = array<i64: 1, 6, 4, 128>}, {transform_indices = @transform_1, window_bounds = array<i64: 1, 6, 4, 128>}, {pipeline_mode = #tpu.pipeline_mode<synchronous>, transform_indices = @transform_2, window_bounds = array<i64: 4, 36>}, {transform_indices = @transform_3, window_bounds = array<i64: 1, 4, 128>}, {transform_indices = @transform_4, window_bounds = array<i64: 1, 4, 2>}]} {
    %c0_i32 = arith.constant 0 : i32
    %0 = arith.cmpi eq, %arg1, %c0_i32 : i32
    %1 = arith.extui %0 : i1 to i32
    %c0_i32_0 = arith.constant 0 : i32
    %2 = arith.cmpi ne, %1, %c0_i32_0 : i32
    scf.if %2 {
      %cst_81 = arith.constant 0.000000e+00 : f32
      %69 = vector.broadcast %cst_81 : f32 to vector<4x2xf32>
      %c0_82 = arith.constant 0 : index
      %c0_83 = arith.constant 0 : index
      %c0_84 = arith.constant 0 : index
      %70 = vector.load %arg6[%c0_82, %c0_83, %c0_84] : memref<1x4x2xf32, #tpu.memory_space<vmem>>, vector<1x4x2xf32>
      %71 = vector.shape_cast %70 : vector<1x4x2xf32> to vector<4x2xf32>
      %72 = vector.shape_cast %69 : vector<4x2xf32> to vector<1x4x2xf32>
      tpu.vector_store %arg6[%c0_82, %c0_83, %c0_84], %72 {strides = array<i32>} : memref<1x4x2xf32, #tpu.memory_space<vmem>>, vector<1x4x2xf32>,
    } else {
    }
    %c0 = arith.constant 0 : index
    %c0_1 = arith.constant 0 : index
    %c0_2 = arith.constant 0 : index
    %c0_3 = arith.constant 0 : index
    %3 = vector.load %arg2[%c0, %c0_1, %c0_2, %c0_3] : memref<1x6x4x128xf32, #tpu.memory_space<vmem>>, vector<1x1x4x128xf32>
    %4 = vector.shape_cast %3 : vector<1x1x4x128xf32> to vector<4x128xf32>
    %c0_4 = arith.constant 0 : index
    %c0_5 = arith.constant 0 : index
    %5 = vector.load %arg7[%c0_4, %c0_5] : memref<36x128xf32, #tpu.memory_space<vmem>>, vector<4x128xf32>
    tpu.vector_store %arg7[%c0_4, %c0_5], %4 {strides = array<i32>} : memref<36x128xf32, #tpu.memory_space<vmem>>, vector<4x128xf32>,
    %c0_6 = arith.constant 0 : index
    %c1 = arith.constant 1 : index
    %c0_7 = arith.constant 0 : index
    %c0_8 = arith.constant 0 : index
    %6 = vector.load %arg2[%c0_6, %c1, %c0_7, %c0_8] : memref<1x6x4x128xf32, #tpu.memory_space<vmem>>, vector<1x1x4x128xf32>
    %7 = vector.shape_cast %6 : vector<1x1x4x128xf32> to vector<4x128xf32>
    %c4 = arith.constant 4 : index
    %c0_9 = arith.constant 0 : index
    %8 = vector.load %arg7[%c4, %c0_9] : memref<36x128xf32, #tpu.memory_space<vmem>>, vector<4x128xf32>
    tpu.vector_store %arg7[%c4, %c0_9], %7 {strides = array<i32>} : memref<36x128xf32, #tpu.memory_space<vmem>>, vector<4x128xf32>,
    %c0_10 = arith.constant 0 : index
    %c2 = arith.constant 2 : index
    %c0_11 = arith.constant 0 : index
    %c0_12 = arith.constant 0 : index
    %9 = vector.load %arg2[%c0_10, %c2, %c0_11, %c0_12] : memref<1x6x4x128xf32, #tpu.memory_space<vmem>>, vector<1x1x4x128xf32>
    %10 = vector.shape_cast %9 : vector<1x1x4x128xf32> to vector<4x128xf32>
    %c8 = arith.constant 8 : index
    %c0_13 = arith.constant 0 : index
    %11 = vector.load %arg7[%c8, %c0_13] : memref<36x128xf32, #tpu.memory_space<vmem>>, vector<4x128xf32>
    tpu.vector_store %arg7[%c8, %c0_13], %10 {strides = array<i32>} : memref<36x128xf32, #tpu.memory_space<vmem>>, vector<4x128xf32>,
    %c0_14 = arith.constant 0 : index
    %c3 = arith.constant 3 : index
    %c0_15 = arith.constant 0 : index
    %c0_16 = arith.constant 0 : index
    %12 = vector.load %arg2[%c0_14, %c3, %c0_15, %c0_16] : memref<1x6x4x128xf32, #tpu.memory_space<vmem>>, vector<1x1x4x128xf32>
    %13 = vector.shape_cast %12 : vector<1x1x4x128xf32> to vector<4x128xf32>
    %c12 = arith.constant 12 : index
    %c0_17 = arith.constant 0 : index
    %14 = vector.load %arg7[%c12, %c0_17] : memref<36x128xf32, #tpu.memory_space<vmem>>, vector<4x128xf32>
    tpu.vector_store %arg7[%c12, %c0_17], %13 {strides = array<i32>} : memref<36x128xf32, #tpu.memory_space<vmem>>, vector<4x128xf32>,
    %c0_18 = arith.constant 0 : index
    %c4_19 = arith.constant 4 : index
    %c0_20 = arith.constant 0 : index
    %c0_21 = arith.constant 0 : index
    %15 = vector.load %arg2[%c0_18, %c4_19, %c0_20, %c0_21] : memref<1x6x4x128xf32, #tpu.memory_space<vmem>>, vector<1x1x4x128xf32>
    %16 = vector.shape_cast %15 : vector<1x1x4x128xf32> to vector<4x128xf32>
    %c16 = arith.constant 16 : index
    %c0_22 = arith.constant 0 : index
    %17 = vector.load %arg7[%c16, %c0_22] : memref<36x128xf32, #tpu.memory_space<vmem>>, vector<4x128xf32>
    tpu.vector_store %arg7[%c16, %c0_22], %16 {strides = array<i32>} : memref<36x128xf32, #tpu.memory_space<vmem>>, vector<4x128xf32>,
    %c0_23 = arith.constant 0 : index
    %c5 = arith.constant 5 : index
    %c0_24 = arith.constant 0 : index
    %c0_25 = arith.constant 0 : index
    %18 = vector.load %arg2[%c0_23, %c5, %c0_24, %c0_25] : memref<1x6x4x128xf32, #tpu.memory_space<vmem>>, vector<1x1x4x128xf32>
    %19 = vector.shape_cast %18 : vector<1x1x4x128xf32> to vector<4x128xf32>
    %c20 = arith.constant 20 : index
    %c0_26 = arith.constant 0 : index
    %20 = vector.load %arg7[%c20, %c0_26] : memref<36x128xf32, #tpu.memory_space<vmem>>, vector<4x128xf32>
    tpu.vector_store %arg7[%c20, %c0_26], %19 {strides = array<i32>} : memref<36x128xf32, #tpu.memory_space<vmem>>, vector<4x128xf32>,
    %c0_27 = arith.constant 0 : index
    %c0_28 = arith.constant 0 : index
    %c0_29 = arith.constant 0 : index
    %c8_30 = arith.constant 8 : index
    %21 = vector.load %arg2[%c0_27, %c0_28, %c0_29, %c8_30] : memref<1x6x4x128xf32, #tpu.memory_space<vmem>>, vector<1x1x4x120xf32>
    %22 = vector.shape_cast %21 : vector<1x1x4x120xf32> to vector<4x120xf32>
    %c24 = arith.constant 24 : index
    %c0_31 = arith.constant 0 : index
    %23 = vector.load %arg7[%c24, %c0_31] : memref<36x128xf32, #tpu.memory_space<vmem>>, vector<4x120xf32>
    tpu.vector_store %arg7[%c24, %c0_31], %22 {strides = array<i32>} : memref<36x128xf32, #tpu.memory_space<vmem>>, vector<4x120xf32>,
    %c0_32 = arith.constant 0 : index
    %c0_33 = arith.constant 0 : index
    %c0_34 = arith.constant 0 : index
    %c0_35 = arith.constant 0 : index
    %24 = vector.load %arg3[%c0_32, %c0_33, %c0_34, %c0_35] : memref<1x6x4x128xf32, #tpu.memory_space<vmem>>, vector<1x1x4x8xf32>
    %25 = vector.shape_cast %24 : vector<1x1x4x8xf32> to vector<4x8xf32>
    %c24_36 = arith.constant 24 : index
    %c120 = arith.constant 120 : index
    %26 = vector.load %arg7[%c24_36, %c120] : memref<36x128xf32, #tpu.memory_space<vmem>>, vector<4x8xf32>
    tpu.vector_store %arg7[%c24_36, %c120], %25 {strides = array<i32>} : memref<36x128xf32, #tpu.memory_space<vmem>>, vector<4x8xf32>,
    %c0_37 = arith.constant 0 : index
    %c1_38 = arith.constant 1 : index
    %c0_39 = arith.constant 0 : index
    %c8_40 = arith.constant 8 : index
    %27 = vector.load %arg2[%c0_37, %c1_38, %c0_39, %c8_40] : memref<1x6x4x128xf32, #tpu.memory_space<vmem>>, vector<1x1x4x120xf32>
    %28 = vector.shape_cast %27 : vector<1x1x4x120xf32> to vector<4x120xf32>
    %c28 = arith.constant 28 : index
    %c0_41 = arith.constant 0 : index
    %29 = vector.load %arg7[%c28, %c0_41] : memref<36x128xf32, #tpu.memory_space<vmem>>, vector<4x120xf32>
    tpu.vector_store %arg7[%c28, %c0_41], %28 {strides = array<i32>} : memref<36x128xf32, #tpu.memory_space<vmem>>, vector<4x120xf32>,
    %c0_42 = arith.constant 0 : index
    %c1_43 = arith.constant 1 : index
    %c0_44 = arith.constant 0 : index
    %c0_45 = arith.constant 0 : index
    %30 = vector.load %arg3[%c0_42, %c1_43, %c0_44, %c0_45] : memref<1x6x4x128xf32, #tpu.memory_space<vmem>>, vector<1x1x4x8xf32>
    %31 = vector.shape_cast %30 : vector<1x1x4x8xf32> to vector<4x8xf32>
    %c28_46 = arith.constant 28 : index
    %c120_47 = arith.constant 120 : index
    %32 = vector.load %arg7[%c28_46, %c120_47] : memref<36x128xf32, #tpu.memory_space<vmem>>, vector<4x8xf32>
    tpu.vector_store %arg7[%c28_46, %c120_47], %31 {strides = array<i32>} : memref<36x128xf32, #tpu.memory_space<vmem>>, vector<4x8xf32>,
    %c0_48 = arith.constant 0 : index
    %c2_49 = arith.constant 2 : index
    %c0_50 = arith.constant 0 : index
    %c8_51 = arith.constant 8 : index
    %33 = vector.load %arg2[%c0_48, %c2_49, %c0_50, %c8_51] : memref<1x6x4x128xf32, #tpu.memory_space<vmem>>, vector<1x1x4x120xf32>
    %34 = vector.shape_cast %33 : vector<1x1x4x120xf32> to vector<4x120xf32>
    %c32 = arith.constant 32 : index
    %c0_52 = arith.constant 0 : index
    %35 = vector.load %arg7[%c32, %c0_52] : memref<36x128xf32, #tpu.memory_space<vmem>>, vector<4x120xf32>
    tpu.vector_store %arg7[%c32, %c0_52], %34 {strides = array<i32>} : memref<36x128xf32, #tpu.memory_space<vmem>>, vector<4x120xf32>,
    %c0_53 = arith.constant 0 : index
    %c2_54 = arith.constant 2 : index
    %c0_55 = arith.constant 0 : index
    %c0_56 = arith.constant 0 : index
    %36 = vector.load %arg3[%c0_53, %c2_54, %c0_55, %c0_56] : memref<1x6x4x128xf32, #tpu.memory_space<vmem>>, vector<1x1x4x8xf32>
    %37 = vector.shape_cast %36 : vector<1x1x4x8xf32> to vector<4x8xf32>
    %c32_57 = arith.constant 32 : index
    %c120_58 = arith.constant 120 : index
    %38 = vector.load %arg7[%c32_57, %c120_58] : memref<36x128xf32, #tpu.memory_space<vmem>>, vector<4x8xf32>
    tpu.vector_store %arg7[%c32_57, %c120_58], %37 {strides = array<i32>} : memref<36x128xf32, #tpu.memory_space<vmem>>, vector<4x8xf32>,
    %c0_59 = arith.constant 0 : index
    %c0_60 = arith.constant 0 : index
    %39 = vector.load %arg4[%c0_59, %c0_60] : memref<4x36xf32, #tpu.memory_space<vmem>>, vector<4x36xf32>
    %c0_61 = arith.constant 0 : index
    %c0_62 = arith.constant 0 : index
    %40 = vector.load %arg7[%c0_61, %c0_62] : memref<36x128xf32, #tpu.memory_space<vmem>>, vector<36x128xf32>
    %cst = arith.constant dense<0.000000e+00> : vector<4x128xf32>
    %41 = tpu.matmul %39, %40, %cst {dimension_numbers = #tpu.dot_dimension_numbers<[1], [0], [0], [1], [0, 0, 1, 1], [], []>} : vector<4x36xf32>, vector<36x128xf32>, vector<4x128xf32> -> vector<4x128xf32>
    %c0_63 = arith.constant 0 : index
    %c0_64 = arith.constant 0 : index
    %c0_65 = arith.constant 0 : index
    %42 = vector.load %arg5[%c0_63, %c0_64, %c0_65] : memref<1x4x128xf32, #tpu.memory_space<vmem>>, vector<1x4x128xf32>
    %43 = vector.shape_cast %42 : vector<1x4x128xf32> to vector<4x128xf32>
    %44 = vector.shape_cast %41 : vector<4x128xf32> to vector<1x4x128xf32>
    tpu.vector_store %arg5[%c0_63, %c0_64, %c0_65], %44 {strides = array<i32>} : memref<1x4x128xf32, #tpu.memory_space<vmem>>, vector<1x4x128xf32>,
    %45 = tpu.iota {dimensions = array<i32: 1>} : vector<4x128xi32>
    %c128_i32 = arith.constant 128 : i32
    %46 = arith.muli %arg1, %c128_i32 : i32
    %c64_i32 = arith.constant 64 : i32
    %47 = arith.subi %c64_i32, %46 : i32
    %48 = vector.broadcast %47 : i32 to vector<4x128xi32>
    %49 = arith.cmpi slt, %45, %48 : vector<4x128xi32>
    %cst_66 = arith.constant 0.000000e+00 : f32
    %50 = vector.broadcast %cst_66 : f32 to vector<4x128xf32>
    %51 = arith.select %49, %41, %50 : vector<4x128xi1>, vector<4x128xf32>
    %c0_67 = arith.constant 0 : index
    %c0_68 = arith.constant 0 : index
    %c0_69 = arith.constant 0 : index
    %52 = vector.load %arg6[%c0_67, %c0_68, %c0_69] : memref<1x4x2xf32, #tpu.memory_space<vmem>>, vector<1x4x1xf32>
    %53 = vector.shape_cast %52 : vector<1x4x1xf32> to vector<4x1xf32>
    %cst_70 = arith.constant dense<0.000000e+00> : vector<4xf32>
    %54 = vector.multi_reduction <add>, %51, %cst_70 [1] : vector<4x128xf32> to vector<4xf32>
    %55 = vector.shape_cast %54 : vector<4xf32> to vector<4x1xf32>
    %56 = arith.addf %53, %55 : vector<4x1xf32>
    %c0_71 = arith.constant 0 : index
    %c0_72 = arith.constant 0 : index
    %c0_73 = arith.constant 0 : index
    %57 = vector.load %arg6[%c0_71, %c0_72, %c0_73] : memref<1x4x2xf32, #tpu.memory_space<vmem>>, vector<1x4x1xf32>
    %58 = vector.shape_cast %57 : vector<1x4x1xf32> to vector<4x1xf32>
    %59 = vector.shape_cast %56 : vector<4x1xf32> to vector<1x4x1xf32>
    tpu.vector_store %arg6[%c0_71, %c0_72, %c0_73], %59 {strides = array<i32>} : memref<1x4x2xf32, #tpu.memory_space<vmem>>, vector<1x4x1xf32>,
    %c0_74 = arith.constant 0 : index
    %c0_75 = arith.constant 0 : index
    %c1_76 = arith.constant 1 : index
    %60 = vector.load %arg6[%c0_74, %c0_75, %c1_76] : memref<1x4x2xf32, #tpu.memory_space<vmem>>, vector<1x4x1xf32>
    %61 = vector.shape_cast %60 : vector<1x4x1xf32> to vector<4x1xf32>
    %62 = arith.mulf %51, %51 : vector<4x128xf32>
    %cst_77 = arith.constant dense<0.000000e+00> : vector<4xf32>
    %63 = vector.multi_reduction <add>, %62, %cst_77 [1] : vector<4x128xf32> to vector<4xf32>
    %64 = vector.shape_cast %63 : vector<4xf32> to vector<4x1xf32>
    %65 = arith.addf %61, %64 : vector<4x1xf32>
    %c0_78 = arith.constant 0 : index
    %c0_79 = arith.constant 0 : index
    %c1_80 = arith.constant 1 : index
    %66 = vector.load %arg6[%c0_78, %c0_79, %c1_80] : memref<1x4x2xf32, #tpu.memory_space<vmem>>, vector<1x4x1xf32>
    %67 = vector.shape_cast %66 : vector<1x4x1xf32> to vector<4x1xf32>
    %68 = vector.shape_cast %65 : vector<4x1xf32> to vector<1x4x1xf32>
    tpu.vector_store %arg6[%c0_78, %c0_79, %c1_80], %68 {strides = array<i32>} : memref<1x4x2xf32, #tpu.memory_space<vmem>>, vector<1x4x1xf32>,
    return
  }
  func.func @transform_0(%arg0: i32, %arg1: i32) -> (i32, i32, i32, i32) {
    %c0_i32 = arith.constant 0 : i32
    %c0_i32_0 = arith.constant 0 : i32
    %c0_i32_1 = arith.constant 0 : i32
    return %arg0, %c0_i32, %c0_i32_0, %arg1 : i32, i32, i32, i32
  }
  func.func @transform_1(%arg0: i32, %arg1: i32) -> (i32, i32, i32, i32) {
    %c1_i32 = arith.constant 1 : i32
    %0 = arith.addi %arg1, %c1_i32 : i32
    %c1_i32_0 = arith.constant 1 : i32
    %1 = arith.muli %0, %c1_i32_0 : i32
    %c0_i32 = arith.constant 0 : i32
    %c0_i32_1 = arith.constant 0 : i32
    %c0_i32_2 = arith.constant 0 : i32
    return %arg0, %c0_i32, %c0_i32_1, %1 : i32, i32, i32, i32
  }
  func.func @transform_2(%arg0: i32, %arg1: i32) -> (i32, i32) {
    %c0_i32 = arith.constant 0 : i32
    %c0_i32_0 = arith.constant 0 : i32
    %c0_i32_1 = arith.constant 0 : i32
    return %c0_i32, %c0_i32_0 : i32, i32
  }
  func.func @transform_3(%arg0: i32, %arg1: i32) -> (i32, i32, i32) {
    %c0_i32 = arith.constant 0 : i32
    %c0_i32_0 = arith.constant 0 : i32
    return %arg0, %c0_i32, %arg1 : i32, i32, i32
  }
  func.func @transform_4(%arg0: i32, %arg1: i32) -> (i32, i32, i32) {
    %c0_i32 = arith.constant 0 : i32
    %c0_i32_0 = arith.constant 0 : i32
    %c0_i32_1 = arith.constant 0 : i32
    return %arg0, %c0_i32, %c0_i32_0 : i32, i32, i32
  }
}

module attributes {stable_mosaic.version = 11 : i64} {
  func.func @_bn_lrelu_kernel(%arg0: i32, %arg1: memref<8x128xf32, #tpu.memory_space<vmem>>, %arg2: memref<8x1xf32, #tpu.memory_space<vmem>>, %arg3: memref<8x1xf32, #tpu.memory_space<vmem>>, %arg4: memref<8x128xf32, #tpu.memory_space<vmem>>) attributes {dimension_semantics = [#tpu.dimension_semantics<parallel>], iteration_bounds = array<i64: 1>, scalar_prefetch = 0 : i64, scratch_operands = 0 : i64, tpu.core_type = #tpu.core_type<tc>, window_params = [{transform_indices = @transform_0, window_bounds = array<i64: 8, 128>}, {transform_indices = @transform_1, window_bounds = array<i64: 8, 1>}, {transform_indices = @transform_2, window_bounds = array<i64: 8, 1>}, {transform_indices = @transform_3, window_bounds = array<i64: 8, 128>}]} {
    %c0 = arith.constant 0 : index
    %c0_0 = arith.constant 0 : index
    %0 = vector.load %arg1[%c0, %c0_0] : memref<8x128xf32, #tpu.memory_space<vmem>>, vector<8x128xf32>
    %c0_1 = arith.constant 0 : index
    %c0_2 = arith.constant 0 : index
    %1 = vector.load %arg2[%c0_1, %c0_2] : memref<8x1xf32, #tpu.memory_space<vmem>>, vector<8x1xf32>
    %2 = vector.broadcast %1 : vector<8x1xf32> to vector<8x128xf32>
    %3 = arith.mulf %0, %2 : vector<8x128xf32>
    %c0_3 = arith.constant 0 : index
    %c0_4 = arith.constant 0 : index
    %4 = vector.load %arg3[%c0_3, %c0_4] : memref<8x1xf32, #tpu.memory_space<vmem>>, vector<8x1xf32>
    %5 = vector.broadcast %4 : vector<8x1xf32> to vector<8x128xf32>
    %6 = arith.addf %3, %5 : vector<8x128xf32>
    %cst = arith.constant 0.000000e+00 : f32
    %7 = vector.broadcast %cst : f32 to vector<8x128xf32>
    %8 = arith.cmpf ogt, %6, %7 : vector<8x128xf32>
    %cst_5 = arith.constant 0.00999999977 : f32
    %9 = vector.broadcast %cst_5 : f32 to vector<8x128xf32>
    %10 = arith.mulf %9, %6 : vector<8x128xf32>
    %11 = arith.select %8, %6, %10 : vector<8x128xi1>, vector<8x128xf32>
    %c0_6 = arith.constant 0 : index
    %c0_7 = arith.constant 0 : index
    %12 = vector.load %arg4[%c0_6, %c0_7] : memref<8x128xf32, #tpu.memory_space<vmem>>, vector<8x128xf32>
    tpu.vector_store %arg4[%c0_6, %c0_7], %11 {strides = array<i32>} : memref<8x128xf32, #tpu.memory_space<vmem>>, vector<8x128xf32>,
    return
  }
  func.func @transform_0(%arg0: i32) -> (i32, i32) {
    %c0_i32 = arith.constant 0 : i32
    %c0_i32_0 = arith.constant 0 : i32
    return %arg0, %c0_i32 : i32, i32
  }
  func.func @transform_1(%arg0: i32) -> (i32, i32) {
    %c0_i32 = arith.constant 0 : i32
    %c0_i32_0 = arith.constant 0 : i32
    return %arg0, %c0_i32 : i32, i32
  }
  func.func @transform_2(%arg0: i32) -> (i32, i32) {
    %c0_i32 = arith.constant 0 : i32
    %c0_i32_0 = arith.constant 0 : i32
    return %arg0, %c0_i32 : i32, i32
  }
  func.func @transform_3(%arg0: i32) -> (i32, i32) {
    %c0_i32 = arith.constant 0 : i32
    %c0_i32_0 = arith.constant 0 : i32
    return %arg0, %c0_i32 : i32, i32
  }
}

</mosaic_0001>

<llo_original>
// kernel: tile.0
$region0: #{tile.0}
  %s0 = inlined_call_operand.vmem [shape: f32[2,4], index: 0, kind: input, shape index: {}]
  %s1 = inlined_call_operand.vmem [shape: f32[8,1], index: 1, kind: output, shape index: {}]
  $region1: #{tile.0} parent=0
    #allocation0 [shape = 'u8[4096]{0}', space=vmem, size = 0x1000, scoped, tag = 'scoped mem for input reshape']
    %s3 = ssub.s32 4, 1
    %v4 = vld [vmem:[%s0] sm:%s3]
    %5 = vst [vmem:[#allocation0] sm:%s3] %v4
    %v6 = vld [vmem:[#allocation0] sm:$0x3]
    %vm7 = vcmask 7168
    %8 = vst.msk [vmem:[%s1] ss:$4 sm:$0x3] %vm7, %v6
    %v9 = vld [vmem:[#allocation0] sm:$0x3]
    %10 = vrot.lane.b32.xlu0 %v9, 127
    %v11 = vpop.permute.xlu0 %10
    %vm12 = vcmask 7168
    %s13 = scalar_lea.vmem %s1, 1
    %14 = vst.msk [vmem:[%s13] ss:$4 sm:$0x3] %vm12, %v11
    %v15 = vld [vmem:[#allocation0] sm:$0x3]
    %16 = vrot.lane.b32.xlu0 %v15, 126
    %v17 = vpop.permute.xlu0 %16
    %vm18 = vcmask 7168
    %s19 = scalar_lea.vmem %s1, 2
    %20 = vst.msk [vmem:[%s19] ss:$4 sm:$0x3] %vm18, %v17
    %v21 = vld [vmem:[#allocation0] sm:$0x3]
    %22 = vrot.lane.b32.xlu0 %v21, 125
    %v23 = vpop.permute.xlu0 %22
    %vm24 = vcmask 7168
    %s25 = scalar_lea.vmem %s1, 3
    %26 = vst.msk [vmem:[%s25] ss:$4 sm:$0x3] %vm24, %v23

// kernel: tile.18
$region0: #{tile.18}
  #allocation0 [shape = 's32[1]{0}', space=sflag, size = 0x4, scoped, tag = 'scoped memory for tile.18']
  %s0 = inlined_call_operand.vmem [shape: f32[4], index: 0, kind: input, shape index: {}]
  %s1 = inlined_call_operand.vmem [shape: f32[2,4], index: 1, kind: output, shape index: {}]
  // Predicated region
  $region2: #{tile.18} parent=0 // pred_check
    _
  $region3: #{tile.18} parent=0 // pred_check_branch
    %3 = sbr.rel (0) target = $region5
  $region4: #{tile.18} parent=0 // pred_region
    _
  $region5: #{tile.18} parent=0 // pred_fallthru
    _
  %v4 = vld [vmem:[%s0] ss:$0 sm:$0xff]
  %5 = vst [vmem:[%s1] sm:$0x3] %v4

// kernel: downsample_forward.3
$region0: #{downsample_forward.3}
  #allocation0 [shape = 'u32[]', space=smem, size = 0x4, offset = 0x4, fixed_abs, tag = 'smem constant byte address 0x4 - core index']
  #allocation1 [shape = 'u32[72,128]{1,0:T(1,128)}', space=vmem, size = 0x9000, scoped, tag = 'internal scratch']
  %s0 = inlined_call_operand.vmem [shape: f32[8,128], index: 0, kind: input, shape index: {}, may-alias: {0,3}]
  %s1 = inlined_call_operand.vmem [shape: f32[8,1], index: 1, kind: input, shape index: {}]
  %s2 = inlined_call_operand.vmem [shape: f32[8,1], index: 2, kind: input, shape index: {}]
  %s3 = inlined_call_operand.vmem [shape: f32[8,128], index: 3, kind: output, shape index: {}, may-alias: {0,3}]
  %s4 = sld [smem:[#allocation0]]
  $region22: #{downsample_forward.3} parent=0
    _
  %s6 = ssub.s32 1, %s4
  %s7 = scalar_select 0, %s6, %s4
  // Predicated region
  $region2: #{downsample_forward.3} parent=0 // pred_check
    _
  $region3: #{downsample_forward.3} parent=0 // pred_check_branch
    %9 = sbr.rel (0) target = $region5
  $region4: #{downsample_forward.3} parent=0 // pred_region
    _
  $region5: #{downsample_forward.3} parent=0 // pred_fallthru
    _
  // Predicated region
  $region6: #{downsample_forward.3} parent=0 // pred_check
    _
  $region7: #{downsample_forward.3} parent=0 // pred_check_branch
    %11 = sbr.rel (0) target = $region9
  $region8: #{downsample_forward.3} parent=0 // pred_region
    _
  $region9: #{downsample_forward.3} parent=0 // pred_fallthru
    _
  // Predicated region
  $region10: #{downsample_forward.3} parent=0 // pred_check
    _
  $region11: #{downsample_forward.3} parent=0 // pred_check_branch
    %13 = sbr.rel (0) target = $region13
  $region12: #{downsample_forward.3} parent=0 // pred_region
    _
  $region13: #{downsample_forward.3} parent=0 // pred_fallthru
    _
  %v14 = vld [vmem:[%s0] sm:$0xff]
  %v15 = vld [vmem:[%s1] sm:$0xff]
  %17 = vset.pattern.permute.xlu0 0
  %18 = vperm.xlu0 %17, %v15
  %v19 = vpop.permute.xlu0 %18
  %v21 = vmul.f32 %v14, %v19
  %v22 = vld [vmem:[%s2] sm:$0xff]
  %24 = vset.pattern.permute.xlu0 0
  %25 = vperm.xlu0 %24, %v22
  %v26 = vpop.permute.xlu0 %25
  %v28 = vadd.f32 %v21, %v26
  %vm29 = vcmp.gt.f32.partialorder %v28, 0.0
  %v30 = vmul.f32 %v28, 0.01
  %v31 = vsel %vm29, %v28, %v30
  %32 = vst [vmem:[%s3] sm:$0xff] %v31
  // Predicated region
  $region14: #{downsample_forward.3} parent=0 // pred_check
    _
  $region15: #{downsample_forward.3} parent=0 // pred_check_branch
    %34 = sbr.rel (0) target = $region17
  $region16: #{downsample_forward.3} parent=0 // pred_region
    _
  $region17: #{downsample_forward.3} parent=0 // pred_fallthru
    _
  // Predicated region
  $region18: #{downsample_forward.3} parent=0 // pred_check
    _
  $region19: #{downsample_forward.3} parent=0 // pred_check_branch
    %36 = sbr.rel (0) target = $region21
  $region20: #{downsample_forward.3} parent=0 // pred_region
    _
  $region21: #{downsample_forward.3} parent=0 // pred_fallthru
    _

// kernel: downsample_forward.2
$region0: #{downsample_forward.2}
  #allocation0 [shape = 'u32[]', space=smem, size = 0x4, offset = 0x4, fixed_abs, tag = 'smem constant byte address 0x4 - core index']
  #allocation1 [shape = 'u32[72,128]{1,0:T(1,128)}', space=vmem, size = 0x9000, scoped, tag = 'internal scratch']
  #allocation2 [shape = 'f32[36,128]{1,0:T(8,128)}', space=vmem, size = 0x5000, scoped, tag = 'scratch operand']
  %s0 = inlined_call_operand.vmem [shape: f32[2,6,4,256], index: 0, kind: input, shape index: {}, may-alias: {0,1}]
  %s1 = inlined_call_operand.vmem [shape: f32[2,6,4,256], index: 1, kind: input, shape index: {}, may-alias: {0,1}]
  %s2 = inlined_call_operand.vmem [shape: f32[4,36], index: 2, kind: input, shape index: {}]
  %s3 = inlined_call_operand.vmem [shape: f32[2,4,128], index: 3, kind: output, shape index: {0}]
  %s4 = inlined_call_operand.vmem [shape: f32[2,4,2], index: 4, kind: output, shape index: {1}]
  %5 = xla_tuple %s3, %s4
  %s6 = sld [smem:[#allocation0]]
  $region139: #{downsample_forward.2} parent=0
    _
  %s8 = ssub.s32 1, %s6
  %s9 = scalar_select 0, %s8, %s6
  $region1: #{downsample_forward.2} parent=0
    #allocation3 [shape = 'u8[24576]{0}', space=vmem, size = 0x6000, scoped, tag = 'input window, operand 0']
    #allocation4 [shape = 'u8[24576]{0}', space=vmem, size = 0x6000, scoped, tag = 'input window, operand 1']
    loop: start=0, step=1, limit=4
    $region2: #{downsample_forward.2} parent=1 // loop_pre_header
      _
    $region3: #{downsample_forward.2} parent=1 // loop_header
      %s11 = sphi 0, %s15
      %p12 = scmp.ge.s32.totalorder %s11, 4
      %s18 = sphi 0, %s30
      %s19 = sphi 0, %s26
      %s20 = sphi 0, %s18
      %s21 = sphi 0, %s19
      %s22 = sphi 0, %s20
      %s23 = sphi 0, %s21
      %s35 = sphi 0, %s37
      %s38 = sphi 0, %s35
      %s39 = sphi 0, %s38
      %s55 = sphi 0, %s39
      %s65 = sphi 0, %s67
      %s68 = sphi 0, %s65
      %s69 = sphi 0, %s68
      %s85 = sphi 0, %s69
      %s89 = sphi 0, %s89
      %s91 = sphi 0, %s89
      %s92 = sphi 0, %s91
      %s106 = sphi 0, %s92
      %s114 = sphi 0, %s116
      %s117 = sphi 0, %s114
      %s118 = sphi 0, %s117
      %s134 = sphi 0, %s118
      %s140 = sphi 0, %s142
      %s143 = sphi 0, %s140
      %s144 = sphi 0, %s143
      %s160 = sphi 0, %s144
    $region4: #{downsample_forward.2} parent=1 // loop_header_branch
      %14 = sbr.rel (%p12) target = $region8
    $region5: #{downsample_forward.2} parent=1 // loop_body
      %s16 = ssub.s32 %s11, 1
      %s17 = ssub.s32 %s11, 2
      %s24 = sadd.s32 1, %s19
      %p25 = scmp.ge.s32.totalorder %s24, 1
      %s26 = scalar_select %p25, 0, %s24
      %s27 = sadd.s32 1, %s18
      %s28 = scalar_select %p25, %s27, %s18
      %p29 = scmp.ge.s32.totalorder %s28, 2
      %s30 = scalar_select %p29, 0, %s28
      %s31 = ssub.s32 %s18, %s30
      %s32 = ssub.s32 %s19, %s26
      %s33 = sor.u32 %s31, %s32
      %p34 = scmp.eq.s32.totalorder %s33, 0
      %s36 = sadd.s32 %s35, 1
      %s37 = scalar_select %p34, %s35, %s36
      %p40 = pneg %p34
      %p41 = scmp.eq.s32.totalorder %s11, 1
      %p42 = por %p40, %p41
      %p43 = scmp.ne.s32.totalorder %s35, %s38
      %p44 = scmp.eq.s32.totalorder %s11, 0
      %p45 = por %p43, %p44
      %p46 = scmp.ne.s32.totalorder %s35, %s38
      %p47 = scmp.eq.s32.totalorder %s16, 1
      %p48 = por %p46, %p47
      %p49 = scmp.ne.s32.totalorder %s38, %s39
      %p50 = scmp.eq.s32.totalorder %s16, 0
      %p51 = por %p49, %p50
      %p52 = scmp.ne.s32.totalorder %s38, %s39
      %p53 = scmp.eq.s32.totalorder %s17, 1
      %p54 = por %p52, %p53
      %p56 = scmp.ne.s32.totalorder %s39, %s55
      %p57 = scmp.eq.s32.totalorder %s17, 0
      %p58 = por %p56, %p57
      %s59 = sadd.s32 %s19, 1
      %s60 = sadd.s32 %s26, 1
      %s61 = ssub.s32 %s18, %s30
      %s62 = ssub.s32 %s59, %s60
      %s63 = sor.u32 %s61, %s62
      %p64 = scmp.eq.s32.totalorder %s63, 0
      %s66 = sadd.s32 %s65, 1
      %s67 = scalar_select %p64, %s65, %s66
      %p70 = pneg %p64
      %p71 = scmp.eq.s32.totalorder %s11, 1
      %p72 = por %p70, %p71
      %p73 = scmp.ne.s32.totalorder %s65, %s68
      %p74 = scmp.eq.s32.totalorder %s11, 0
      %p75 = por %p73, %p74
      %p76 = scmp.ne.s32.totalorder %s65, %s68
      %p77 = scmp.eq.s32.totalorder %s16, 1
      %p78 = por %p76, %p77
      %p79 = scmp.ne.s32.totalorder %s68, %s69
      %p80 = scmp.eq.s32.totalorder %s16, 0
      %p81 = por %p79, %p80
      %p82 = scmp.ne.s32.totalorder %s68, %s69
      %p83 = scmp.eq.s32.totalorder %s17, 1
      %p84 = por %p82, %p83
      %p86 = scmp.ne.s32.totalorder %s69, %s85
      %p87 = scmp.eq.s32.totalorder %s17, 0
      %p88 = por %p86, %p87
      %s90 = sadd.s32 %s89, 1
      %p93 = scmp.eq.s32.totalorder %s11, 1
      %p94 = scmp.ne.s32.totalorder %s89, %s91
      %p95 = scmp.eq.s32.totalorder %s11, 0
      %p96 = por %p94, %p95
      %p97 = scmp.ne.s32.totalorder %s89, %s91
      %p98 = scmp.eq.s32.totalorder %s16, 1
      %p99 = por %p97, %p98
      %p100 = scmp.ne.s32.totalorder %s91, %s92
      %p101 = scmp.eq.s32.totalorder %s16, 0
      %p102 = por %p100, %p101
      %p103 = scmp.ne.s32.totalorder %s91, %s92
      %p104 = scmp.eq.s32.totalorder %s17, 1
      %p105 = por %p103, %p104
      %p107 = scmp.ne.s32.totalorder %s92, %s106
      %p108 = scmp.eq.s32.totalorder %s17, 0
      %p109 = por %p107, %p108
      %s110 = ssub.s32 %s18, %s30
      %s111 = ssub.s32 %s19, %s26
      %s112 = sor.u32 %s110, %s111
      %p113 = scmp.eq.s32.totalorder %s112, 0
      %s115 = sadd.s32 %s114, 1
      %s116 = scalar_select %p113, %s114, %s115
      %p119 = pneg %p113
      %p120 = scmp.eq.s32.totalorder %s11, 1
      %p121 = por %p119, %p120
      %p122 = scmp.ne.s32.totalorder %s114, %s117
      %p123 = scmp.eq.s32.totalorder %s11, 0
      %p124 = por %p122, %p123
      %p125 = scmp.ne.s32.totalorder %s114, %s117
      %p126 = scmp.eq.s32.totalorder %s16, 1
      %p127 = por %p125, %p126
      %p128 = scmp.ne.s32.totalorder %s117, %s118
      %p129 = scmp.eq.s32.totalorder %s16, 0
      %p130 = por %p128, %p129
      %p131 = scmp.ne.s32.totalorder %s117, %s118
      %p132 = scmp.eq.s32.totalorder %s17, 1
      %p133 = por %p131, %p132
      %p135 = scmp.ne.s32.totalorder %s118, %s134
      %p136 = scmp.eq.s32.totalorder %s17, 0
      %p137 = por %p135, %p136
      %s138 = ssub.s32 %s18, %s30
      %p139 = scmp.eq.s32.totalorder %s138, 0
      %s141 = sadd.s32 %s140, 1
      %s142 = scalar_select %p139, %s140, %s141
      %p145 = pneg %p139
      %p146 = scmp.eq.s32.totalorder %s11, 1
      %p147 = por %p145, %p146
      %p148 = scmp.ne.s32.totalorder %s140, %s143
      %p149 = scmp.eq.s32.totalorder %s11, 0
      %p150 = por %p148, %p149
      %p151 = scmp.ne.s32.totalorder %s140, %s143
      %p152 = scmp.eq.s32.totalorder %s16, 1
      %p153 = por %p151, %p152
      %p154 = scmp.ne.s32.totalorder %s143, %s144
      %p155 = scmp.eq.s32.totalorder %s16, 0
      %p156 = por %p154, %p155
      %p157 = scmp.ne.s32.totalorder %s143, %s144
      %p158 = scmp.eq.s32.totalorder %s17, 1
      %p159 = por %p157, %p158
      %p161 = scmp.ne.s32.totalorder %s144, %s160
      %p162 = scmp.eq.s32.totalorder %s17, 0
      %p163 = por %p161, %p162
      %p164 = scmp.le.s32.totalorder 1, %s11
      %p165 = scmp.lt.s32.totalorder %s11, 3
      %p166 = pnand %p164, %p165
      %p167 = pneg %p166
      // Predicated region
      $region9: #{downsample_forward.2} parent=5 // pred_check
        _
      $region10: #{downsample_forward.2} parent=5 // pred_check_branch
        %169 = sbr.rel (%p166) target = $region12
      $region11: #{downsample_forward.2} parent=5 // pred_region
        %s170 = ssub.s32 %s11, 1
        // Predicated region
        $region13: #{downsample_forward.2} parent=11 // pred_check
          %p171 = pneg %p102
        $region14: #{downsample_forward.2} parent=11 // pred_check_branch
          %173 = sbr.rel (%p171) target = $region16
        $region15: #{downsample_forward.2} parent=11 // pred_region
          _
        $region16: #{downsample_forward.2} parent=11 // pred_fallthru
          _
      $region12: #{downsample_forward.2} parent=5 // pred_fallthru
        _
      %p174 = scmp.lt.s32.totalorder %s11, 2
      // Predicated region
      $region17: #{downsample_forward.2} parent=5 // pred_check
        %p175 = pneg %p174
      $region18: #{downsample_forward.2} parent=5 // pred_check_branch
        %177 = sbr.rel (%p175) target = $region20
      $region19: #{downsample_forward.2} parent=5 // pred_region
        // Predicated region
        $region21: #{downsample_forward.2} parent=19 // pred_check
          %p178 = pneg %p45
        $region22: #{downsample_forward.2} parent=19 // pred_check_branch
          %180 = sbr.rel (%p178) target = $region24
        $region23: #{downsample_forward.2} parent=19 // pred_region
          %s181 = sand.u32 %s35, 1
          %s182 = sand.u32 %s35, 1
          %s183 = smul.addr %s182, 24
          %s184 = scalar_lea.vmem [#allocation3], %s183
          %s185 = smul.addr %s18, 12
          %s186 = sadd.s32 %s19, %s185
          %s187 = smul.addr %s186, 4
          %s188 = scalar_lea.vmem %s0, %s187
          // Predicated region
          $region25: #{downsample_forward.2} parent=23 // pred_check
            _
          $region26: #{downsample_forward.2} parent=23 // pred_check_branch
            %190 = sbr.rel (0) target = $region28
          $region27: #{downsample_forward.2} parent=23 // pred_region
            // Predicated region
            $region29: #{downsample_forward.2} parent=27 // pred_check
              _
            $region30: #{downsample_forward.2} parent=27 // pred_check_branch
              %192 = sbr.rel target = $region32
            $region31: #{downsample_forward.2} parent=27 // pred_region
              // Predicated region
              $region44: #{downsample_forward.2} parent=31 // pred_check
                _
              $region45: #{downsample_forward.2} parent=31 // pred_check_branch
                %218 = sbr.rel (0) target = $region47
              $region46: #{downsample_forward.2} parent=31 // pred_region
                loop: start=0, step=1, limit=1
                $region48: #{downsample_forward.2} parent=46 // loop_pre_header
                  _
                $region49: #{downsample_forward.2} parent=46 // loop_header
                  %s220 = sphi 0, %s224
                  %p221 = scmp.ge.s32.totalorder %s220, 1
                  %s225 = sphi %s188, %s188
                  %s226 = sphi %s184, %s184
                $region50: #{downsample_forward.2} parent=46 // loop_header_branch
                  %223 = sbr.rel (%p221) target = $region54
                $region51: #{downsample_forward.2} parent=46 // loop_body
                  _
                $region52: #{downsample_forward.2} parent=46 // loop_footer
                  %s224 = sadd.s32 1, %s220
                $region53: #{downsample_forward.2} parent=46 // loop_footer_branch
                  %219 = sbr.rel target = $region49
                $region54: #{downsample_forward.2} parent=46 // loop_exit
                  _
                %s228 = ssub.s32 16, 1
                loop: start=0, step=1, limit=1
                $region55: #{downsample_forward.2} parent=46 // loop_pre_header
                  _
                $region56: #{downsample_forward.2} parent=46 // loop_header
                  %s230 = sphi 0, %s234
                  %p231 = scmp.ge.s32.totalorder %s230, 1
                  %s235 = sphi %s188, %s188
                  %s236 = sphi %s184, %s184
                $region57: #{downsample_forward.2} parent=46 // loop_header_branch
                  %233 = sbr.rel (%p231) target = $region61
                $region58: #{downsample_forward.2} parent=46 // loop_body
                  %v237 = vld [vmem:[%s235] sm:%s228]
                  %238 = vst [vmem:[%s236] sm:%s228] %v237
                  %v239 = vld [vmem:[%s235 + $0x8] sm:%s228]
                  %240 = vst [vmem:[%s236 + $0x4] sm:%s228] %v239
                  %v241 = vld [vmem:[%s235 + $0x10] sm:%s228]
                  %242 = vst [vmem:[%s236 + $0x8] sm:%s228] %v241
                  %v243 = vld [vmem:[%s235 + $0x18] sm:%s228]
                  %244 = vst [vmem:[%s236 + $0xc] sm:%s228] %v243
                  %v245 = vld [vmem:[%s235 + $0x20] sm:%s228]
                  %246 = vst [vmem:[%s236 + $0x10] sm:%s228] %v245
                  %v247 = vld [vmem:[%s235 + $0x28] sm:%s228]
                  %248 = vst [vmem:[%s236 + $0x14] sm:%s228] %v247
                $region59: #{downsample_forward.2} parent=46 // loop_footer
                  %s234 = sadd.s32 1, %s230
                $region60: #{downsample_forward.2} parent=46 // loop_footer_branch
                  %229 = sbr.rel target = $region56
                $region61: #{downsample_forward.2} parent=46 // loop_exit
                  _
              $region47: #{downsample_forward.2} parent=31 // pred_fallthru
                _
            $region32: #{downsample_forward.2} parent=27 // pred_fallthru
              _
            // Predicated region
            $region33: #{downsample_forward.2} parent=27 // pred_check
              _
            $region34: #{downsample_forward.2} parent=27 // pred_check_branch
              %194 = sbr.rel (0) target = $region36
            $region35: #{downsample_forward.2} parent=27 // pred_region
              %s196 = ssub.s32 16, 1
              loop: start=0, step=1, limit=1
              $region37: #{downsample_forward.2} parent=35 // loop_pre_header
                _
              $region38: #{downsample_forward.2} parent=35 // loop_header
                %s198 = sphi 0, %s202
                %p199 = scmp.ge.s32.totalorder %s198, 1
                %s203 = sphi %s188, %s188
                %s204 = sphi %s184, %s184
              $region39: #{downsample_forward.2} parent=35 // loop_header_branch
                %201 = sbr.rel (%p199) target = $region43
              $region40: #{downsample_forward.2} parent=35 // loop_body
                %v205 = vld [vmem:[%s203] sm:%s196]
                %206 = vst [vmem:[%s204] sm:%s196] %v205
                %v207 = vld [vmem:[%s203 + $0x8] sm:%s196]
                %208 = vst [vmem:[%s204 + $0x4] sm:%s196] %v207
                %v209 = vld [vmem:[%s203 + $0x10] sm:%s196]
                %210 = vst [vmem:[%s204 + $0x8] sm:%s196] %v209
                %v211 = vld [vmem:[%s203 + $0x18] sm:%s196]
                %212 = vst [vmem:[%s204 + $0xc] sm:%s196] %v211
                %v213 = vld [vmem:[%s203 + $0x20] sm:%s196]
                %214 = vst [vmem:[%s204 + $0x10] sm:%s196] %v213
                %v215 = vld [vmem:[%s203 + $0x28] sm:%s196]
                %216 = vst [vmem:[%s204 + $0x14] sm:%s196] %v215
              $region41: #{downsample_forward.2} parent=35 // loop_footer
                %s202 = sadd.s32 1, %s198
              $region42: #{downsample_forward.2} parent=35 // loop_footer_branch
                %197 = sbr.rel target = $region38
              $region43: #{downsample_forward.2} parent=35 // loop_exit
                _
            $region36: #{downsample_forward.2} parent=27 // pred_fallthru
              _
          $region28: #{downsample_forward.2} parent=23 // pred_fallthru
            _
          %249 = vnop
        $region24: #{downsample_forward.2} parent=19 // pred_fallthru
          _
        // Predicated region
        $region62: #{downsample_forward.2} parent=19 // pred_check
          %p250 = pneg %p75
        $region63: #{downsample_forward.2} parent=19 // pred_check_branch
          %252 = sbr.rel (%p250) target = $region65
        $region64: #{downsample_forward.2} parent=19 // pred_region
          %s253 = sand.u32 %s65, 1
          %s254 = sand.u32 %s65, 1
          %s255 = smul.addr %s254, 24
          %s256 = scalar_lea.vmem [#allocation4], %s255
          %s257 = sadd.s32 %s19, 1
          %s258 = smul.addr %s18, 12
          %s259 = sadd.s32 %s257, %s258
          %s260 = smul.addr %s259, 4
          %s261 = scalar_lea.vmem %s1, %s260
          // Predicated region
          $region66: #{downsample_forward.2} parent=64 // pred_check
            _
          $region67: #{downsample_forward.2} parent=64 // pred_check_branch
            %263 = sbr.rel (0) target = $region69
          $region68: #{downsample_forward.2} parent=64 // pred_region
            // Predicated region
            $region70: #{downsample_forward.2} parent=68 // pred_check
              _
            $region71: #{downsample_forward.2} parent=68 // pred_check_branch
              %265 = sbr.rel target = $region73
            $region72: #{downsample_forward.2} parent=68 // pred_region
              // Predicated region
              $region85: #{downsample_forward.2} parent=72 // pred_check
                _
              $region86: #{downsample_forward.2} parent=72 // pred_check_branch
                %291 = sbr.rel (0) target = $region88
              $region87: #{downsample_forward.2} parent=72 // pred_region
                loop: start=0, step=1, limit=1
                $region89: #{downsample_forward.2} parent=87 // loop_pre_header
                  _
                $region90: #{downsample_forward.2} parent=87 // loop_header
                  %s293 = sphi 0, %s297
                  %p294 = scmp.ge.s32.totalorder %s293, 1
                  %s298 = sphi %s261, %s261
                  %s299 = sphi %s256, %s256
                $region91: #{downsample_forward.2} parent=87 // loop_header_branch
                  %296 = sbr.rel (%p294) target = $region95
                $region92: #{downsample_forward.2} parent=87 // loop_body
                  _
                $region93: #{downsample_forward.2} parent=87 // loop_footer
                  %s297 = sadd.s32 1, %s293
                $region94: #{downsample_forward.2} parent=87 // loop_footer_branch
                  %292 = sbr.rel target = $region90
                $region95: #{downsample_forward.2} parent=87 // loop_exit
                  _
                %s301 = ssub.s32 16, 1
                loop: start=0, step=1, limit=1
                $region96: #{downsample_forward.2} parent=87 // loop_pre_header
                  _
                $region97: #{downsample_forward.2} parent=87 // loop_header
                  %s303 = sphi 0, %s307
                  %p304 = scmp.ge.s32.totalorder %s303, 1
                  %s308 = sphi %s261, %s261
                  %s309 = sphi %s256, %s256
                $region98: #{downsample_forward.2} parent=87 // loop_header_branch
                  %306 = sbr.rel (%p304) target = $region102
                $region99: #{downsample_forward.2} parent=87 // loop_body
                  %v310 = vld [vmem:[%s308] sm:%s301]
                  %311 = vst [vmem:[%s309] sm:%s301] %v310
                  %v312 = vld [vmem:[%s308 + $0x8] sm:%s301]
                  %313 = vst [vmem:[%s309 + $0x4] sm:%s301] %v312
                  %v314 = vld [vmem:[%s308 + $0x10] sm:%s301]
                  %315 = vst [vmem:[%s309 + $0x8] sm:%s301] %v314
                  %v316 = vld [vmem:[%s308 + $0x18] sm:%s301]
                  %317 = vst [vmem:[%s309 + $0xc] sm:%s301] %v316
                  %v318 = vld [vmem:[%s308 + $0x20] sm:%s301]
                  %319 = vst [vmem:[%s309 + $0x10] sm:%s301] %v318
                  %v320 = vld [vmem:[%s308 + $0x28] sm:%s301]
                  %321 = vst [vmem:[%s309 + $0x14] sm:%s301] %v320
                $region100: #{downsample_forward.2} parent=87 // loop_footer
                  %s307 = sadd.s32 1, %s303
                $region101: #{downsample_forward.2} parent=87 // loop_footer_branch
                  %302 = sbr.rel target = $region97
                $region102: #{downsample_forward.2} parent=87 // loop_exit
                  _
              $region88: #{downsample_forward.2} parent=72 // pred_fallthru
                _
            $region73: #{downsample_forward.2} parent=68 // pred_fallthru
              _
            // Predicated region
            $region74: #{downsample_forward.2} parent=68 // pred_check
              _
            $region75: #{downsample_forward.2} parent=68 // pred_check_branch
              %267 = sbr.rel (0) target = $region77
            $region76: #{downsample_forward.2} parent=68 // pred_region
              %s269 = ssub.s32 16, 1
              loop: start=0, step=1, limit=1
              $region78: #{downsample_forward.2} parent=76 // loop_pre_header
                _
              $region79: #{downsample_forward.2} parent=76 // loop_header
                %s271 = sphi 0, %s275
                %p272 = scmp.ge.s32.totalorder %s271, 1
                %s276 = sphi %s261, %s261
                %s277 = sphi %s256, %s256
              $region80: #{downsample_forward.2} parent=76 // loop_header_branch
                %274 = sbr.rel (%p272) target = $region84
              $region81: #{downsample_forward.2} parent=76 // loop_body
                %v278 = vld [vmem:[%s276] sm:%s269]
                %279 = vst [vmem:[%s277] sm:%s269] %v278
                %v280 = vld [vmem:[%s276 + $0x8] sm:%s269]
                %281 = vst [vmem:[%s277 + $0x4] sm:%s269] %v280
                %v282 = vld [vmem:[%s276 + $0x10] sm:%s269]
                %283 = vst [vmem:[%s277 + $0x8] sm:%s269] %v282
                %v284 = vld [vmem:[%s276 + $0x18] sm:%s269]
                %285 = vst [vmem:[%s277 + $0xc] sm:%s269] %v284
                %v286 = vld [vmem:[%s276 + $0x20] sm:%s269]
                %287 = vst [vmem:[%s277 + $0x10] sm:%s269] %v286
                %v288 = vld [vmem:[%s276 + $0x28] sm:%s269]
                %289 = vst [vmem:[%s277 + $0x14] sm:%s269] %v288
              $region82: #{downsample_forward.2} parent=76 // loop_footer
                %s275 = sadd.s32 1, %s271
              $region83: #{downsample_forward.2} parent=76 // loop_footer_branch
                %270 = sbr.rel target = $region79
              $region84: #{downsample_forward.2} parent=76 // loop_exit
                _
            $region77: #{downsample_forward.2} parent=68 // pred_fallthru
              _
          $region69: #{downsample_forward.2} parent=64 // pred_fallthru
            _
          %322 = vnop
        $region65: #{downsample_forward.2} parent=19 // pred_fallthru
          _
      $region20: #{downsample_forward.2} parent=5 // pred_fallthru
        _
      %p323 = scmp.le.s32.totalorder 1, %s11
      %p324 = scmp.lt.s32.totalorder %s11, 3
      %p325 = pnand %p323, %p324
      %p326 = pneg %p325
      // Predicated region
      $region103: #{downsample_forward.2} parent=5 // pred_check
        _
      $region104: #{downsample_forward.2} parent=5 // pred_check_branch
        %328 = sbr.rel (%p325) target = $region106
      $region105: #{downsample_forward.2} parent=5 // pred_region
        %s329 = ssub.s32 %s11, 1
        %s330 = sand.u32 %s38, 1
        %s331 = sand.u32 %s38, 1
        %s332 = smul.addr %s331, 24
        %s333 = scalar_lea.vmem [#allocation3], %s332
        // Predicated region
        $region107: #{downsample_forward.2} parent=105 // pred_check
          %p334 = pneg %p51
        $region108: #{downsample_forward.2} parent=105 // pred_check_branch
          %336 = sbr.rel (%p334) target = $region110
        $region109: #{downsample_forward.2} parent=105 // pred_region
          _
        $region110: #{downsample_forward.2} parent=105 // pred_fallthru
          _
        %s337 = sand.u32 %s68, 1
        %s338 = sand.u32 %s68, 1
        %s339 = smul.addr %s338, 24
        %s340 = scalar_lea.vmem [#allocation4], %s339
        // Predicated region
        $region111: #{downsample_forward.2} parent=105 // pred_check
          %p341 = pneg %p81
        $region112: #{downsample_forward.2} parent=105 // pred_check_branch
          %343 = sbr.rel (%p341) target = $region114
        $region113: #{downsample_forward.2} parent=105 // pred_region
          _
        $region114: #{downsample_forward.2} parent=105 // pred_fallthru
          _
        %s344 = sand.u32 %s38, 1
        %s345 = sand.u32 %s38, 1
        %s346 = smul.addr %s345, 24
        %s347 = scalar_lea.vmem [#allocation3], %s346
        %p348 = pneg %p51
        %p349 = pneg %p48
        %s350 = sand.u32 %s68, 1
        %s351 = sand.u32 %s68, 1
        %s352 = smul.addr %s351, 24
        %s353 = scalar_lea.vmem [#allocation4], %s352
        %p354 = pneg %p81
        %p355 = pneg %p78
        %p356 = pneg %p102
        %p357 = pneg %p99
        %p358 = pneg %p130
        %p359 = pneg %p127
        %p360 = scmp.lt.s32.totalorder %s20, 1
        %s361 = scalar_select %p360, %s20, 1
        %p362 = scmp.lt.s32.totalorder %s21, 0
        %s363 = scalar_select %p362, %s21, 0
        %s364 = sadd.s32 %s363, %s361
        %s365 = smul.addr %s364, 4
        %s366 = scalar_lea.vmem %s3, %s365
        %p367 = pneg %p156
        %p368 = pneg %p153
        %p369 = scmp.lt.s32.totalorder %s20, 1
        %s370 = scalar_select %p369, %s20, 1
        %s371 = smul.addr %s370, 4
        %s372 = scalar_lea.vmem %s4, %s371
        %s373 = sadd.s32 %s21, 1
        %p374 = scmp.lt.s32.totalorder %s20, 1
        %s375 = scalar_select %p374, %s20, 1
        %p376 = scmp.lt.s32.totalorder %s21, 0
        %s377 = scalar_select %p376, %s21, 0
        %s378 = sadd.s32 %s377, %s375
        %s379 = smul.addr %s378, 4
        %s380 = scalar_lea.vmem %s3, %s379
        %p381 = scmp.lt.s32.totalorder %s20, 1
        %s382 = scalar_select %p381, %s20, 1
        %s383 = smul.addr %s382, 4
        %s384 = scalar_lea.vmem %s4, %s383
        %p385 = scmp.eq.s32.totalorder %s21, 0
        // Predicated region
        $region115: #{downsample_forward.2} parent=105 // pred_check
          %p386 = pneg %p385
        $region116: #{downsample_forward.2} parent=105 // pred_check_branch
          %388 = sbr.rel (%p386) target = $region118
        $region117: #{downsample_forward.2} parent=105 // pred_region
          %vm389 = vcmask 11264
          %390 = vst.msk [vmem:[%s384] sm:$0xf] %vm389, 0.0
        $region118: #{downsample_forward.2} parent=105 // pred_fallthru
          _
        %v391 = vld [vmem:[%s333] sm:$0xf]
        %392 = vst [vmem:[#allocation2] sm:$0xf] %v391
        %s393 = scalar_lea.vmem %s333, 4 [#allocation3]
        %v394 = vld [vmem:[%s393] sm:$0xf]
        %395 = vst [vmem:[#allocation2 + $0x4] sm:$0xf] %v394
        %s396 = scalar_lea.vmem %s333, 8 [#allocation3]
        %v397 = vld [vmem:[%s396] sm:$0xf]
        %398 = vst [vmem:[#allocation2 + $0x8] sm:$0xf] %v397
        %s399 = scalar_lea.vmem %s333, 12 [#allocation3]
        %v400 = vld [vmem:[%s399] sm:$0xf]
        %401 = vst [vmem:[#allocation2 + $0xc] sm:$0xf] %v400
        %s402 = scalar_lea.vmem %s333, 16 [#allocation3]
        %v403 = vld [vmem:[%s402] sm:$0xf]
        %404 = vst [vmem:[#allocation2 + $0x10] sm:$0xf] %v403
        %s405 = scalar_lea.vmem %s333, 20 [#allocation3]
        %v406 = vld [vmem:[%s405] sm:$0xf]
        %407 = vst [vmem:[#allocation2 + $0x14] sm:$0xf] %v406
        %v408 = vld [vmem:[%s333] sm:$0xf]
        %410 = vrot.lane.b32.xlu0 %v408, 120
        %v411 = vpop.permute.xlu0 %410
        %vm413 = vcmask 977920
        %414 = vst.msk [vmem:[#allocation2 + $0x18] sm:$0xf] %vm413, %v411
        %v415 = vld [vmem:[%s340] sm:$0xf]
        %417 = vrot.lane.b32.xlu0 %v415, 120
        %v418 = vpop.permute.xlu0 %417
        %vm420 = vcmask 1044416
        %421 = vst.msk [vmem:[#allocation2 + $0x18] sm:$0xf] %vm420, %v418
        %v422 = vld [vmem:[%s393] sm:$0xf]
        %424 = vrot.lane.b32.xlu0 %v422, 120
        %v425 = vpop.permute.xlu0 %424
        %427 = vst.msk [vmem:[#allocation2 + $0x1c] sm:$0xf] %vm413, %v425
        %s428 = scalar_lea.vmem %s340, 4 [#allocation4]
        %v429 = vld [vmem:[%s428] sm:$0xf]
        %431 = vrot.lane.b32.xlu0 %v429, 120
        %v432 = vpop.permute.xlu0 %431
        %434 = vst.msk [vmem:[#allocation2 + $0x1c] sm:$0xf] %vm420, %v432
        %v435 = vld [vmem:[%s396] sm:$0xf]
        %437 = vrot.lane.b32.xlu0 %v435, 120
        %v438 = vpop.permute.xlu0 %437
        %440 = vst.msk [vmem:[#allocation2 + $0x20] sm:$0xf] %vm413, %v438
        %s441 = scalar_lea.vmem %s340, 8 [#allocation4]
        %v442 = vld [vmem:[%s441] sm:$0xf]
        %444 = vrot.lane.b32.xlu0 %v442, 120
        %v445 = vpop.permute.xlu0 %444
        %447 = vst.msk [vmem:[#allocation2 + $0x20] sm:$0xf] %vm420, %v445
        %v448 = vld [vmem:[%s2] sm:$0xf]
        %v449 = vld [vmem:[#allocation2] sm:$0xff]
        %v450 = vld [vmem:[#allocation2 + $0x8] sm:$0xff]
        %v451 = vld [vmem:[#allocation2 + $0x10] sm:$0xff]
        %v452 = vld [vmem:[#allocation2 + $0x18] sm:$0xff]
        %v453 = vld [vmem:[#allocation2 + $0x20] sm:$0xf]
        %vm454 = vcmask 293888
        %v456 = vsel %vm454, %v448, 0
        %vm458 = vcmask 1043456
        %v460 = vsel %vm458, %v453, 0
        %462 = vmatpush.msra.mxu0 0.0
        %463 = vmatpush.msra.mxu0 0.0
        %464 = vmatpush.msra.mxu0 0.0
        %465 = vmatpush.msra.mxu0 0.0
        %466 = vmatpush.msra.mxu0 0.0
        %467 = vmatpush.msra.mxu0 0.0
        %468 = vmatpush.msra.mxu0 0.0
        %469 = vmatpush.msra.mxu0 0.0
        %470 = vmatpush.msra.mxu0 0.0
        %471 = vmatpush.msra.mxu0 0.0
        %472 = vmatpush.msra.mxu0 0.0
        %473 = vmatpush.msra.mxu0 %v460
        %474 = vmatpush.msra.mxu0 %v452
        %475 = vmatpush.msra.mxu0 %v451
        %476 = vmatpush.msra.mxu0 %v450
        %477 = vmatpush.msra.mxu0 %v449
        %478 = vmatmul.f32.gmra.mxu0 %v456
        %v479 = vpop.f32.mrf.mxu0
        %v480 = vadd.f32 0.0, %v479
        %481 = vdwg.mxu0
        %482 = vst [vmem:[%s380] sm:$0xf] %v480
        %v483 = vlaneseq
        %v484 = vand.u32 %v483, 127
        %s485 = smul.u32 %s21, 128
        %s486 = ssub.s32 64, %s485
        %v487 = vstv %s486
        %vm488 = vcmp.lt.s32.totalorder %v484, %v487
        %v489 = vsel %vm488, %v480, 0.0
        %v490 = vld [vmem:[%s384] sm:$0xf]
        %v491 = vsel %vm458, %v489, 0.0
        %492 = vadd.xlane.f32.xlu0 %v491
        %v493 = vpop.xlane.xlu0 %492
        %v494 = vadd.f32 %v490, %v493
        %vm495 = vcmask 3072
        %496 = vst.msk [vmem:[%s384] sm:$0xf] %vm495, %v494
        %v497 = vld [vmem:[%s384] sm:$0xf]
        %v498 = vmul.f32 %v489, %v489
        %v499 = vsel %vm458, %v498, 0.0
        %500 = vadd.xlane.f32.xlu0 %v499
        %v501 = vpop.xlane.xlu0 %500
        %v502 = vadd.f32 %v497, %v501
        %vm503 = vcmask 11272
        %504 = vst.msk [vmem:[%s384] sm:$0xf] %vm503, %v502
        %p505 = scmp.lt.s32.totalorder %s20, 1
        %s506 = scalar_select %p505, %s20, 1
        %p507 = scmp.lt.s32.totalorder %s21, 0
        %s508 = scalar_select %p507, %s21, 0
        %s509 = sadd.s32 %s508, %s506
        %s510 = smul.addr %s509, 4
        %s511 = scalar_lea.vmem %s3, %s510
        %p512 = scmp.lt.s32.totalorder %s20, 1
        %s513 = scalar_select %p512, %s20, 1
        %s514 = smul.addr %s513, 4
        %s515 = scalar_lea.vmem %s4, %s514
        // Predicated region
        $region119: #{downsample_forward.2} parent=105 // pred_check
          %p516 = pneg %p127
        $region120: #{downsample_forward.2} parent=105 // pred_check_branch
          %518 = sbr.rel (%p516) target = $region122
        $region121: #{downsample_forward.2} parent=105 // pred_region
          _
        $region122: #{downsample_forward.2} parent=105 // pred_fallthru
          _
        // Predicated region
        $region123: #{downsample_forward.2} parent=105 // pred_check
          %p519 = pneg %p153
        $region124: #{downsample_forward.2} parent=105 // pred_check_branch
          %521 = sbr.rel (%p519) target = $region126
        $region125: #{downsample_forward.2} parent=105 // pred_region
          _
        $region126: #{downsample_forward.2} parent=105 // pred_fallthru
          _
      $region106: #{downsample_forward.2} parent=5 // pred_fallthru
        _
      %p522 = scmp.le.s32.totalorder 2, %s11
      // Predicated region
      $region127: #{downsample_forward.2} parent=5 // pred_check
        %p523 = pneg %p522
      $region128: #{downsample_forward.2} parent=5 // pred_check_branch
        %525 = sbr.rel (%p523) target = $region130
      $region129: #{downsample_forward.2} parent=5 // pred_region
        %s526 = ssub.s32 %s11, 2
        // Predicated region
        $region131: #{downsample_forward.2} parent=129 // pred_check
          %p527 = pneg %p133
        $region132: #{downsample_forward.2} parent=129 // pred_check_branch
          %529 = sbr.rel (%p527) target = $region134
        $region133: #{downsample_forward.2} parent=129 // pred_region
          %p530 = scmp.lt.s32.totalorder %s22, 1
          %s531 = scalar_select %p530, %s22, 1
          %p532 = scmp.lt.s32.totalorder %s23, 0
          %s533 = scalar_select %p532, %s23, 0
          %s534 = sadd.s32 %s533, %s531
          %s535 = smul.addr %s534, 4
          %s536 = scalar_lea.vmem %s3, %s535
        $region134: #{downsample_forward.2} parent=129 // pred_fallthru
          _
        // Predicated region
        $region135: #{downsample_forward.2} parent=129 // pred_check
          %p537 = pneg %p159
        $region136: #{downsample_forward.2} parent=129 // pred_check_branch
          %539 = sbr.rel (%p537) target = $region138
        $region137: #{downsample_forward.2} parent=129 // pred_region
          %p540 = scmp.lt.s32.totalorder %s22, 1
          %s541 = scalar_select %p540, %s22, 1
          %s542 = smul.addr %s541, 4
          %s543 = scalar_lea.vmem %s4, %s542
        $region138: #{downsample_forward.2} parent=129 // pred_fallthru
          _
      $region130: #{downsample_forward.2} parent=5 // pred_fallthru
        _
    $region6: #{downsample_forward.2} parent=1 // loop_footer
      %s15 = sadd.s32 1, %s11
    $region7: #{downsample_forward.2} parent=1 // loop_footer_branch
      %10 = sbr.rel target = $region3
    $region8: #{downsample_forward.2} parent=1 // loop_exit
      _

</llo_original>
